<compile_context>
chip_gen: v7x
topology: tpu7x:2x2x1
jax: 0.10.0
libtpu: 0.0.40
codegen_flags: <defaults>
</compile_context>

<pallas_src>
import jax
import jax.numpy as jnp
from jax.experimental import pallas as pl
from jax.experimental.pallas import tpu as pltpu

IMAGE_SIZE = 784
NUM_CLASSES = 10
OUT_PAD = 128          # lane-dense padded class dimension for the output store
TILE_B_MAX = 512       # batch rows per grid step (multiple of 8, fits VMEM on v5e/v6e/v7x)
LAYER_DIMS = [(IMAGE_SIZE, 128), (128, 64), (64, 10), (10, 10), (10, 10), (10, 10)]


def _round_up(n, m):
    return ((n + m - 1) // m) * m


def _mlp_kernel(x_ref,
                w0_ref, b0_ref, w1_ref, b1_ref, w2_ref, b2_ref,
                w3_ref, b3_ref, w4_ref, b4_ref, w5_ref, b5_ref,
                out_ref):
    """One batch tile: 6 x (dense + ReLU), then masked log_softmax over 10 classes."""

    def dense_relu(h, w_ref, b_ref):
        # bf16 operands into the MXU, f32 accumulation; bias add + ReLU in f32.
        y = jnp.dot(h.astype(jnp.bfloat16), w_ref[...],
                    preferred_element_type=jnp.float32)
        return jnp.maximum(y + b_ref[...], 0.0)

    h = x_ref[...]                                # (TILE_B, 784) bf16
    h = dense_relu(h, w0_ref, b0_ref)             # (TILE_B, 128) f32
    h = dense_relu(h, w1_ref, b1_ref)             # (TILE_B, 64)
    h = dense_relu(h, w2_ref, b2_ref)             # (TILE_B, 10)
    h = dense_relu(h, w3_ref, b3_ref)             # (TILE_B, 10)
    h = dense_relu(h, w4_ref, b4_ref)             # (TILE_B, 10)
    h = dense_relu(h, w5_ref, b5_ref)             # (TILE_B, 128); cols >= 10 are 0

    # Numerically-stable log_softmax over the first NUM_CLASSES lanes only
    # (lanes 10..127 are zero padding from the padded final layer).
    col = jax.lax.broadcasted_iota(jnp.int32, h.shape, 1)
    valid = col < NUM_CLASSES
    hm = jnp.where(valid, h, jnp.float32(-1e30))
    m = jnp.max(hm, axis=-1, keepdims=True)
    s = hm - m
    ssum = jnp.sum(jnp.where(valid, jnp.exp(s), 0.0), axis=-1, keepdims=True)
    logp = s - jnp.log(ssum)
    out_ref[...] = jnp.where(valid, logp, 0.0)


@jax.jit
def neural_net_e_forward(x, params):
    """x: any shape whose rows flatten to IMAGE_SIZE. Returns (B, 10) log-probs (f32)."""
    x2 = x.reshape(-1, IMAGE_SIZE)
    batch = x2.shape[0]

    # Static (trace-time) tiling decisions.
    tile_b = min(TILE_B_MAX, _round_up(batch, 8))
    padded_b = _round_up(batch, tile_b)

    x2 = x2.astype(jnp.bfloat16)
    if padded_b != batch:
        x2 = jnp.pad(x2, ((0, padded_b - batch), (0, 0)))

    # Weights stored (in_features, out_features) in bf16; biases (1, out) in f32.
    # Final layer zero-padded to OUT_PAD output lanes for a lane-dense store.
    flat_params = []
    n_layers = len(params)
    for idx, (w, b) in enumerate(params):
        w = w.astype(jnp.bfloat16)
        b = b.reshape(1, -1).astype(jnp.float32)
        if idx == n_layers - 1:
            pad = OUT_PAD - w.shape[1]
            w = jnp.pad(w, ((0, 0), (0, pad)))
            b = jnp.pad(b, ((0, 0), (0, pad)))
        flat_params += [w, b]

    grid = (padded_b // tile_b,)
    in_specs = [pl.BlockSpec((tile_b, IMAGE_SIZE), lambda i: (i, 0))]
    for p in flat_params:
        # Full-array blocks with a constant index_map -> resident across steps.
        in_specs.append(pl.BlockSpec(p.shape, lambda i: (0, 0)))

    out = pl.pallas_call(
        _mlp_kernel,
        out_shape=jax.ShapeDtypeStruct((padded_b, OUT_PAD), jnp.float32),
        grid=grid,
        in_specs=in_specs,
        out_specs=pl.BlockSpec((tile_b, OUT_PAD), lambda i: (i, 0)),
        compiler_params=pltpu.CompilerParams(
            dimension_semantics=("parallel",)),
    )(x2, *flat_params)

    return out[:batch, :NUM_CLASSES]


def init_params(key):
    """Deterministic init matching torch.nn.Linear fan-in bounds (stored transposed)."""
    params = []
    for fan_in, fan_out in LAYER_DIMS:
        key, kw, kb = jax.random.split(key, 3)
        bound = 1.0 / (fan_in ** 0.5)
        w = jax.random.uniform(kw, (fan_in, fan_out), jnp.float32, -bound, bound)
        b = jax.random.uniform(kb, (1, fan_out), jnp.float32, -bound, bound)
        params.append((w, b))
    return params


def reference_forward(x, params):
    """Pure-JAX f32 reference of the torch forward (ReLU after every layer)."""
    h = x.reshape(-1, IMAGE_SIZE).astype(jnp.float32)
    for w, b in params:
        h = jnp.maximum(h @ w + b.reshape(1, -1), 0.0)
    return jax.nn.log_softmax(h, axis=-1)


if __name__ == "__main__":
    key = jax.random.PRNGKey(0)
    key, k_x = jax.random.split(key)
    params = init_params(key)

    # Primary small MNIST-like batch: (B, 1, 28, 28) -> view(-1, 784) in the wrapper.
    batch = 8
    x = jax.random.normal(k_x, (batch, 1, 28, 28), dtype=jnp.float32)
    out = jax.block_until_ready(neural_net_e_forward(x, params))
    assert out.shape == (batch, NUM_CLASSES), out.shape
    assert jnp.allclose(jnp.exp(out).sum(axis=-1), 1.0, atol=1e-5)
    ref = reference_forward(x, params)
    assert jnp.allclose(out, ref, atol=5e-2), float(jnp.max(jnp.abs(out - ref)))

    # Exercise the tiled path: grid > 1 and batch not a multiple of the tile.
    key, k_x2 = jax.random.split(key)
    x_big = jax.random.normal(k_x2, (600, IMAGE_SIZE), dtype=jnp.float32)
    out_big = jax.block_until_ready(neural_net_e_forward(x_big, params))
    assert out_big.shape == (600, NUM_CLASSES), out_big.shape
    ref_big = reference_forward(x_big, params)
    assert jnp.allclose(out_big, ref_big, atol=5e-2)

    print("KERNEL_OK")
</pallas_src>

<mosaic_0001>
module attributes {stable_mosaic.version = 11 : i64} {
  func.func @_mlp_kernel(%arg0: i32, %arg1: memref<8x784xbf16, #tpu.memory_space<vmem>>, %arg2: memref<784x128xbf16, #tpu.memory_space<vmem>>, %arg3: memref<1x128xf32, #tpu.memory_space<vmem>>, %arg4: memref<128x64xbf16, #tpu.memory_space<vmem>>, %arg5: memref<1x64xf32, #tpu.memory_space<vmem>>, %arg6: memref<64x10xbf16, #tpu.memory_space<vmem>>, %arg7: memref<1x10xf32, #tpu.memory_space<vmem>>, %arg8: memref<10x10xbf16, #tpu.memory_space<vmem>>, %arg9: memref<1x10xf32, #tpu.memory_space<vmem>>, %arg10: memref<10x10xbf16, #tpu.memory_space<vmem>>, %arg11: memref<1x10xf32, #tpu.memory_space<vmem>>, %arg12: memref<10x128xbf16, #tpu.memory_space<vmem>>, %arg13: memref<1x128xf32, #tpu.memory_space<vmem>>, %arg14: memref<8x128xf32, #tpu.memory_space<vmem>>) attributes {dimension_semantics = [#tpu.dimension_semantics<parallel>], iteration_bounds = array<i64: 1>, scalar_prefetch = 0 : i64, scratch_operands = 0 : i64, tpu.core_type = #tpu.core_type<tc>, window_params = [{transform_indices = @transform_0, window_bounds = array<i64: 8, 784>}, {pipeline_mode = #tpu.pipeline_mode<synchronous>, transform_indices = @transform_1, window_bounds = array<i64: 784, 128>}, {pipeline_mode = #tpu.pipeline_mode<synchronous>, transform_indices = @transform_2, window_bounds = array<i64: 1, 128>}, {pipeline_mode = #tpu.pipeline_mode<synchronous>, transform_indices = @transform_3, window_bounds = array<i64: 128, 64>}, {pipeline_mode = #tpu.pipeline_mode<synchronous>, transform_indices = @transform_4, window_bounds = array<i64: 1, 64>}, {pipeline_mode = #tpu.pipeline_mode<synchronous>, transform_indices = @transform_5, window_bounds = array<i64: 64, 10>}, {pipeline_mode = #tpu.pipeline_mode<synchronous>, transform_indices = @transform_6, window_bounds = array<i64: 1, 10>}, {pipeline_mode = #tpu.pipeline_mode<synchronous>, transform_indices = @transform_7, window_bounds = array<i64: 10, 10>}, {pipeline_mode = #tpu.pipeline_mode<synchronous>, transform_indices = @transform_8, window_bounds = array<i64: 1, 10>}, {pipeline_mode = #tpu.pipeline_mode<synchronous>, transform_indices = @transform_9, window_bounds = array<i64: 10, 10>}, {pipeline_mode = #tpu.pipeline_mode<synchronous>, transform_indices = @transform_10, window_bounds = array<i64: 1, 10>}, {pipeline_mode = #tpu.pipeline_mode<synchronous>, transform_indices = @transform_11, window_bounds = array<i64: 10, 128>}, {pipeline_mode = #tpu.pipeline_mode<synchronous>, transform_indices = @transform_12, window_bounds = array<i64: 1, 128>}, {transform_indices = @transform_13, window_bounds = array<i64: 8, 128>}]} {
    %c0 = arith.constant 0 : index
    %c0_0 = arith.constant 0 : index
    %0 = vector.load %arg1[%c0, %c0_0] : memref<8x784xbf16, #tpu.memory_space<vmem>>, vector<8x784xbf16>
    %c0_1 = arith.constant 0 : index
    %c0_2 = arith.constant 0 : index
    %1 = vector.load %arg2[%c0_1, %c0_2] : memref<784x128xbf16, #tpu.memory_space<vmem>>, vector<784x128xbf16>
    %cst = arith.constant dense<0.000000e+00> : vector<8x128xf32>
    %2 = tpu.matmul %0, %1, %cst {dimension_numbers = #tpu.dot_dimension_numbers<[1], [0], [0], [1], [0, 0, 1, 1], [], []>} : vector<8x784xbf16>, vector<784x128xbf16>, vector<8x128xf32> -> vector<8x128xf32>
    %c0_3 = arith.constant 0 : index
    %c0_4 = arith.constant 0 : index
    %3 = vector.load %arg3[%c0_3, %c0_4] : memref<1x128xf32, #tpu.memory_space<vmem>>, vector<1x128xf32>
    %4 = vector.broadcast %3 : vector<1x128xf32> to vector<8x128xf32>
    %5 = arith.addf %2, %4 : vector<8x128xf32>
    %cst_5 = arith.constant 0.000000e+00 : f32
    %6 = vector.broadcast %cst_5 : f32 to vector<8x128xf32>
    %7 = arith.maximumf %5, %6 : vector<8x128xf32>
    %8 = arith.truncf %7 : vector<8x128xf32> to vector<8x128xbf16>
    %c0_6 = arith.constant 0 : index
    %c0_7 = arith.constant 0 : index
    %9 = vector.load %arg4[%c0_6, %c0_7] : memref<128x64xbf16, #tpu.memory_space<vmem>>, vector<128x64xbf16>
    %cst_8 = arith.constant dense<0.000000e+00> : vector<8x64xf32>
    %10 = tpu.matmul %8, %9, %cst_8 {dimension_numbers = #tpu.dot_dimension_numbers<[1], [0], [0], [1], [0, 0, 1, 1], [], []>} : vector<8x128xbf16>, vector<128x64xbf16>, vector<8x64xf32> -> vector<8x64xf32>
    %c0_9 = arith.constant 0 : index
    %c0_10 = arith.constant 0 : index
    %11 = vector.load %arg5[%c0_9, %c0_10] : memref<1x64xf32, #tpu.memory_space<vmem>>, vector<1x64xf32>
    %12 = vector.broadcast %11 : vector<1x64xf32> to vector<8x64xf32>
    %13 = arith.addf %10, %12 : vector<8x64xf32>
    %cst_11 = arith.constant 0.000000e+00 : f32
    %14 = vector.broadcast %cst_11 : f32 to vector<8x64xf32>
    %15 = arith.maximumf %13, %14 : vector<8x64xf32>
    %16 = arith.truncf %15 : vector<8x64xf32> to vector<8x64xbf16>
    %c0_12 = arith.constant 0 : index
    %c0_13 = arith.constant 0 : index
    %17 = vector.load %arg6[%c0_12, %c0_13] : memref<64x10xbf16, #tpu.memory_space<vmem>>, vector<64x10xbf16>
    %cst_14 = arith.constant dense<0.000000e+00> : vector<8x10xf32>
    %18 = tpu.matmul %16, %17, %cst_14 {dimension_numbers = #tpu.dot_dimension_numbers<[1], [0], [0], [1], [0, 0, 1, 1], [], []>} : vector<8x64xbf16>, vector<64x10xbf16>, vector<8x10xf32> -> vector<8x10xf32>
    %c0_15 = arith.constant 0 : index
    %c0_16 = arith.constant 0 : index
    %19 = vector.load %arg7[%c0_15, %c0_16] : memref<1x10xf32, #tpu.memory_space<vmem>>, vector<1x10xf32>
    %20 = vector.broadcast %19 : vector<1x10xf32> to vector<8x10xf32>
    %21 = arith.addf %18, %20 : vector<8x10xf32>
    %cst_17 = arith.constant 0.000000e+00 : f32
    %22 = vector.broadcast %cst_17 : f32 to vector<8x10xf32>
    %23 = arith.maximumf %21, %22 : vector<8x10xf32>
    %24 = arith.truncf %23 : vector<8x10xf32> to vector<8x10xbf16>
    %c0_18 = arith.constant 0 : index
    %c0_19 = arith.constant 0 : index
    %25 = vector.load %arg8[%c0_18, %c0_19] : memref<10x10xbf16, #tpu.memory_space<vmem>>, vector<10x10xbf16>
    %cst_20 = arith.constant dense<0.000000e+00> : vector<8x10xf32>
    %26 = tpu.matmul %24, %25, %cst_20 {dimension_numbers = #tpu.dot_dimension_numbers<[1], [0], [0], [1], [0, 0, 1, 1], [], []>} : vector<8x10xbf16>, vector<10x10xbf16>, vector<8x10xf32> -> vector<8x10xf32>
    %c0_21 = arith.constant 0 : index
    %c0_22 = arith.constant 0 : index
    %27 = vector.load %arg9[%c0_21, %c0_22] : memref<1x10xf32, #tpu.memory_space<vmem>>, vector<1x10xf32>
    %28 = vector.broadcast %27 : vector<1x10xf32> to vector<8x10xf32>
    %29 = arith.addf %26, %28 : vector<8x10xf32>
    %cst_23 = arith.constant 0.000000e+00 : f32
    %30 = vector.broadcast %cst_23 : f32 to vector<8x10xf32>
    %31 = arith.maximumf %29, %30 : vector<8x10xf32>
    %32 = arith.truncf %31 : vector<8x10xf32> to vector<8x10xbf16>
    %c0_24 = arith.constant 0 : index
    %c0_25 = arith.constant 0 : index
    %33 = vector.load %arg10[%c0_24, %c0_25] : memref<10x10xbf16, #tpu.memory_space<vmem>>, vector<10x10xbf16>
    %cst_26 = arith.constant dense<0.000000e+00> : vector<8x10xf32>
    %34 = tpu.matmul %32, %33, %cst_26 {dimension_numbers = #tpu.dot_dimension_numbers<[1], [0], [0], [1], [0, 0, 1, 1], [], []>} : vector<8x10xbf16>, vector<10x10xbf16>, vector<8x10xf32> -> vector<8x10xf32>
    %c0_27 = arith.constant 0 : index
    %c0_28 = arith.constant 0 : index
    %35 = vector.load %arg11[%c0_27, %c0_28] : memref<1x10xf32, #tpu.memory_space<vmem>>, vector<1x10xf32>
    %36 = vector.broadcast %35 : vector<1x10xf32> to vector<8x10xf32>
    %37 = arith.addf %34, %36 : vector<8x10xf32>
    %cst_29 = arith.constant 0.000000e+00 : f32
    %38 = vector.broadcast %cst_29 : f32 to vector<8x10xf32>
    %39 = arith.maximumf %37, %38 : vector<8x10xf32>
    %40 = arith.truncf %39 : vector<8x10xf32> to vector<8x10xbf16>
    %c0_30 = arith.constant 0 : index
    %c0_31 = arith.constant 0 : index
    %41 = vector.load %arg12[%c0_30, %c0_31] : memref<10x128xbf16, #tpu.memory_space<vmem>>, vector<10x128xbf16>
    %cst_32 = arith.constant dense<0.000000e+00> : vector<8x128xf32>
    %42 = tpu.matmul %40, %41, %cst_32 {dimension_numbers = #tpu.dot_dimension_numbers<[1], [0], [0], [1], [0, 0, 1, 1], [], []>} : vector<8x10xbf16>, vector<10x128xbf16>, vector<8x128xf32> -> vector<8x128xf32>
    %c0_33 = arith.constant 0 : index
    %c0_34 = arith.constant 0 : index
    %43 = vector.load %arg13[%c0_33, %c0_34] : memref<1x128xf32, #tpu.memory_space<vmem>>, vector<1x128xf32>
    %44 = vector.broadcast %43 : vector<1x128xf32> to vector<8x128xf32>
    %45 = arith.addf %42, %44 : vector<8x128xf32>
    %cst_35 = arith.constant 0.000000e+00 : f32
    %46 = vector.broadcast %cst_35 : f32 to vector<8x128xf32>
    %47 = arith.maximumf %45, %46 : vector<8x128xf32>
    %48 = tpu.iota {dimensions = array<i32: 1>} : vector<8x128xi32>
    %c10_i32 = arith.constant 10 : i32
    %49 = vector.broadcast %c10_i32 : i32 to vector<8x128xi32>
    %50 = arith.cmpi slt, %48, %49 : vector<8x128xi32>
    %cst_36 = arith.constant -1.000000e+30 : f32
    %51 = vector.broadcast %cst_36 : f32 to vector<8x128xf32>
    %52 = arith.select %50, %47, %51 : vector<8x128xi1>, vector<8x128xf32>
    %cst_37 = arith.constant dense<0xFF800000> : vector<8xf32>
    %53 = vector.multi_reduction <maximumf>, %52, %cst_37 [1] : vector<8x128xf32> to vector<8xf32>
    %54 = vector.shape_cast %53 : vector<8xf32> to vector<8x1xf32>
    %55 = vector.broadcast %54 : vector<8x1xf32> to vector<8x128xf32>
    %56 = arith.subf %52, %55 : vector<8x128xf32>
    %57 = math.exp %56 : vector<8x128xf32>
    %cst_38 = arith.constant 0.000000e+00 : f32
    %58 = vector.broadcast %cst_38 : f32 to vector<8x128xf32>
    %59 = arith.select %50, %57, %58 : vector<8x128xi1>, vector<8x128xf32>
    %cst_39 = arith.constant dense<0.000000e+00> : vector<8xf32>
    %60 = vector.multi_reduction <add>, %59, %cst_39 [1] : vector<8x128xf32> to vector<8xf32>
    %61 = vector.shape_cast %60 : vector<8xf32> to vector<8x1xf32>
    %62 = math.log %61 : vector<8x1xf32>
    %63 = vector.broadcast %62 : vector<8x1xf32> to vector<8x128xf32>
    %64 = arith.subf %56, %63 : vector<8x128xf32>
    %cst_40 = arith.constant 0.000000e+00 : f32
    %65 = vector.broadcast %cst_40 : f32 to vector<8x128xf32>
    %66 = arith.select %50, %64, %65 : vector<8x128xi1>, vector<8x128xf32>
    %c0_41 = arith.constant 0 : index
    %c0_42 = arith.constant 0 : index
    %67 = vector.load %arg14[%c0_41, %c0_42] : memref<8x128xf32, #tpu.memory_space<vmem>>, vector<8x128xf32>
    tpu.vector_store %arg14[%c0_41, %c0_42], %66 {strides = array<i32>} : memref<8x128xf32, #tpu.memory_space<vmem>>, vector<8x128xf32>,
    return
  }
  func.func @transform_0(%arg0: i32) -> (i32, i32) {
    %c0_i32 = arith.constant 0 : i32
    %c0_i32_0 = arith.constant 0 : i32
    return %arg0, %c0_i32 : i32, i32
  }
  func.func @transform_1(%arg0: i32) -> (i32, i32) {
    %c0_i32 = arith.constant 0 : i32
    %c0_i32_0 = arith.constant 0 : i32
    %c0_i32_1 = arith.constant 0 : i32
    return %c0_i32, %c0_i32_0 : i32, i32
  }
  func.func @transform_2(%arg0: i32) -> (i32, i32) {
    %c0_i32 = arith.constant 0 : i32
    %c0_i32_0 = arith.constant 0 : i32
    %c0_i32_1 = arith.constant 0 : i32
    return %c0_i32, %c0_i32_0 : i32, i32
  }
  func.func @transform_3(%arg0: i32) -> (i32, i32) {
    %c0_i32 = arith.constant 0 : i32
    %c0_i32_0 = arith.constant 0 : i32
    %c0_i32_1 = arith.constant 0 : i32
    return %c0_i32, %c0_i32_0 : i32, i32
  }
  func.func @transform_4(%arg0: i32) -> (i32, i32) {
    %c0_i32 = arith.constant 0 : i32
    %c0_i32_0 = arith.constant 0 : i32
    %c0_i32_1 = arith.constant 0 : i32
    return %c0_i32, %c0_i32_0 : i32, i32
  }
  func.func @transform_5(%arg0: i32) -> (i32, i32) {
    %c0_i32 = arith.constant 0 : i32
    %c0_i32_0 = arith.constant 0 : i32
    %c0_i32_1 = arith.constant 0 : i32
    return %c0_i32, %c0_i32_0 : i32, i32
  }
  func.func @transform_6(%arg0: i32) -> (i32, i32) {
    %c0_i32 = arith.constant 0 : i32
    %c0_i32_0 = arith.constant 0 : i32
    %c0_i32_1 = arith.constant 0 : i32
    return %c0_i32, %c0_i32_0 : i32, i32
  }
  func.func @transform_7(%arg0: i32) -> (i32, i32) {
    %c0_i32 = arith.constant 0 : i32
    %c0_i32_0 = arith.constant 0 : i32
    %c0_i32_1 = arith.constant 0 : i32
    return %c0_i32, %c0_i32_0 : i32, i32
  }
  func.func @transform_8(%arg0: i32) -> (i32, i32) {
    %c0_i32 = arith.constant 0 : i32
    %c0_i32_0 = arith.constant 0 : i32
    %c0_i32_1 = arith.constant 0 : i32
    return %c0_i32, %c0_i32_0 : i32, i32
  }
  func.func @transform_9(%arg0: i32) -> (i32, i32) {
    %c0_i32 = arith.constant 0 : i32
    %c0_i32_0 = arith.constant 0 : i32
    %c0_i32_1 = arith.constant 0 : i32
    return %c0_i32, %c0_i32_0 : i32, i32
  }
  func.func @transform_10(%arg0: i32) -> (i32, i32) {
    %c0_i32 = arith.constant 0 : i32
    %c0_i32_0 = arith.constant 0 : i32
    %c0_i32_1 = arith.constant 0 : i32
    return %c0_i32, %c0_i32_0 : i32, i32
  }
  func.func @transform_11(%arg0: i32) -> (i32, i32) {
    %c0_i32 = arith.constant 0 : i32
    %c0_i32_0 = arith.constant 0 : i32
    %c0_i32_1 = arith.constant 0 : i32
    return %c0_i32, %c0_i32_0 : i32, i32
  }
  func.func @transform_12(%arg0: i32) -> (i32, i32) {
    %c0_i32 = arith.constant 0 : i32
    %c0_i32_0 = arith.constant 0 : i32
    %c0_i32_1 = arith.constant 0 : i32
    return %c0_i32, %c0_i32_0 : i32, i32
  }
  func.func @transform_13(%arg0: i32) -> (i32, i32) {
    %c0_i32 = arith.constant 0 : i32
    %c0_i32_0 = arith.constant 0 : i32
    return %arg0, %c0_i32 : i32, i32
  }
}

</mosaic_0001>

<llo_original>
// kernel: neural_net_e_forward.1
$region0: #{neural_net_e_forward.1}
  #allocation0 [shape = 'u32[]', space=smem, size = 0x4, offset = 0x4, fixed_abs, tag = 'smem constant byte address 0x4 - core index']
  #allocation1 [shape = 'u32[144,128]{1,0:T(1,128)}', space=vmem, size = 0x12000, scoped, tag = 'internal scratch']
  %s0 = inlined_call_operand.vmem [shape: bf16[8,784], index: 0, kind: input, shape index: {}]
  %s1 = inlined_call_operand.vmem [shape: bf16[784,128], index: 1, kind: input, shape index: {}]
  %s2 = inlined_call_operand.vmem [shape: f32[1,128], index: 2, kind: input, shape index: {}]
  %s3 = inlined_call_operand.vmem [shape: bf16[128,64], index: 3, kind: input, shape index: {}]
  %s4 = inlined_call_operand.vmem [shape: f32[1,64], index: 4, kind: input, shape index: {}]
  %s5 = inlined_call_operand.vmem [shape: bf16[64,10], index: 5, kind: input, shape index: {}]
  %s6 = inlined_call_operand.vmem [shape: f32[1,10], index: 6, kind: input, shape index: {}]
  %s7 = inlined_call_operand.vmem [shape: bf16[10,10], index: 7, kind: input, shape index: {}]
  %s8 = inlined_call_operand.vmem [shape: f32[1,10], index: 8, kind: input, shape index: {}]
  %s9 = inlined_call_operand.vmem [shape: bf16[10,10], index: 9, kind: input, shape index: {}]
  %s10 = inlined_call_operand.vmem [shape: f32[1,10], index: 10, kind: input, shape index: {}]
  %s11 = inlined_call_operand.vmem [shape: bf16[10,128], index: 11, kind: input, shape index: {}]
  %s12 = inlined_call_operand.vmem [shape: f32[1,128], index: 12, kind: input, shape index: {}]
  %s13 = inlined_call_operand.hbm [shape: f32[8,128], index: 13, kind: output, shape index: {}]
  %s14 = sld [smem:[#allocation0]]
  $region62: #{neural_net_e_forward.1} parent=0
    _
  %s16 = ssub.s32 1, %s14
  %s17 = scalar_select 0, %s16, %s14
  $region1: #{neural_net_e_forward.1} parent=0
    #allocation2 [shape = 'u8[4096]{0}', space=vmem, size = 0x1000, scoped, tag = 'output window, operand 0, single buffered']
    #allocation3 [shape = 's32[1]{0}', space=sflag, size = 0x4, scoped, tag = 'scoped memory for neural_net_e_forward.1']
    %18 = vsyncpa [#allocation3], 0
    // Predicated region
    $region2: #{neural_net_e_forward.1} parent=1 // pred_check
      _
    $region3: #{neural_net_e_forward.1} parent=1 // pred_check_branch
      %20 = sbr.rel (0) target = $region5
    $region4: #{neural_net_e_forward.1} parent=1 // pred_region
      _
    $region5: #{neural_net_e_forward.1} parent=1 // pred_fallthru
      _
    // Predicated region
    $region6: #{neural_net_e_forward.1} parent=1 // pred_check
      _
    $region7: #{neural_net_e_forward.1} parent=1 // pred_check_branch
      %22 = sbr.rel (0) target = $region9
    $region8: #{neural_net_e_forward.1} parent=1 // pred_region
      _
    $region9: #{neural_net_e_forward.1} parent=1 // pred_fallthru
      _
    // Predicated region
    $region10: #{neural_net_e_forward.1} parent=1 // pred_check
      _
    $region11: #{neural_net_e_forward.1} parent=1 // pred_check_branch
      %24 = sbr.rel (0) target = $region13
    $region12: #{neural_net_e_forward.1} parent=1 // pred_region
      _
    $region13: #{neural_net_e_forward.1} parent=1 // pred_fallthru
      _
    // Predicated region
    $region14: #{neural_net_e_forward.1} parent=1 // pred_check
      _
    $region15: #{neural_net_e_forward.1} parent=1 // pred_check_branch
      %26 = sbr.rel (0) target = $region17
    $region16: #{neural_net_e_forward.1} parent=1 // pred_region
      _
    $region17: #{neural_net_e_forward.1} parent=1 // pred_fallthru
      _
    // Predicated region
    $region18: #{neural_net_e_forward.1} parent=1 // pred_check
      _
    $region19: #{neural_net_e_forward.1} parent=1 // pred_check_branch
      %28 = sbr.rel (0) target = $region21
    $region20: #{neural_net_e_forward.1} parent=1 // pred_region
      _
    $region21: #{neural_net_e_forward.1} parent=1 // pred_fallthru
      _
    // Predicated region
    $region22: #{neural_net_e_forward.1} parent=1 // pred_check
      _
    $region23: #{neural_net_e_forward.1} parent=1 // pred_check_branch
      %30 = sbr.rel (0) target = $region25
    $region24: #{neural_net_e_forward.1} parent=1 // pred_region
      _
    $region25: #{neural_net_e_forward.1} parent=1 // pred_fallthru
      _
    // Predicated region
    $region26: #{neural_net_e_forward.1} parent=1 // pred_check
      _
    $region27: #{neural_net_e_forward.1} parent=1 // pred_check_branch
      %32 = sbr.rel (0) target = $region29
    $region28: #{neural_net_e_forward.1} parent=1 // pred_region
      _
    $region29: #{neural_net_e_forward.1} parent=1 // pred_fallthru
      _
    // Predicated region
    $region30: #{neural_net_e_forward.1} parent=1 // pred_check
      _
    $region31: #{neural_net_e_forward.1} parent=1 // pred_check_branch
      %34 = sbr.rel (0) target = $region33
    $region32: #{neural_net_e_forward.1} parent=1 // pred_region
      _
    $region33: #{neural_net_e_forward.1} parent=1 // pred_fallthru
      _
    // Predicated region
    $region34: #{neural_net_e_forward.1} parent=1 // pred_check
      _
    $region35: #{neural_net_e_forward.1} parent=1 // pred_check_branch
      %36 = sbr.rel (0) target = $region37
    $region36: #{neural_net_e_forward.1} parent=1 // pred_region
      _
    $region37: #{neural_net_e_forward.1} parent=1 // pred_fallthru
      _
    // Predicated region
    $region38: #{neural_net_e_forward.1} parent=1 // pred_check
      _
    $region39: #{neural_net_e_forward.1} parent=1 // pred_check_branch
      %38 = sbr.rel (0) target = $region41
    $region40: #{neural_net_e_forward.1} parent=1 // pred_region
      _
    $region41: #{neural_net_e_forward.1} parent=1 // pred_fallthru
      _
    // Predicated region
    $region42: #{neural_net_e_forward.1} parent=1 // pred_check
      _
    $region43: #{neural_net_e_forward.1} parent=1 // pred_check_branch
      %40 = sbr.rel (0) target = $region45
    $region44: #{neural_net_e_forward.1} parent=1 // pred_region
      _
    $region45: #{neural_net_e_forward.1} parent=1 // pred_fallthru
      _
    // Predicated region
    $region46: #{neural_net_e_forward.1} parent=1 // pred_check
      _
    $region47: #{neural_net_e_forward.1} parent=1 // pred_check_branch
      %42 = sbr.rel (0) target = $region49
    $region48: #{neural_net_e_forward.1} parent=1 // pred_region
      _
    $region49: #{neural_net_e_forward.1} parent=1 // pred_fallthru
      _
    // Predicated region
    $region50: #{neural_net_e_forward.1} parent=1 // pred_check
      _
    $region51: #{neural_net_e_forward.1} parent=1 // pred_check_branch
      %44 = sbr.rel (0) target = $region53
    $region52: #{neural_net_e_forward.1} parent=1 // pred_region
      _
    $region53: #{neural_net_e_forward.1} parent=1 // pred_fallthru
      _
    %v46 = vld [vmem:[%s0] sm:$0xff]
    %v47 = vld [vmem:[%s0 + $0x8] sm:$0xff]
    %v48 = vld [vmem:[%s0 + $0x10] sm:$0xff]
    %v49 = vld [vmem:[%s0 + $0x18] sm:$0xf]
    %v50 = vld [vmem:[%s1] sm:$0xf]
    %v51 = vld [vmem:[%s1 + $0x4] sm:$0xf]
    %v52 = vld [vmem:[%s1 + $0x8] sm:$0xf]
    %v53 = vld [vmem:[%s1 + $0xc] sm:$0xf]
    %v54 = vld [vmem:[%s1 + $0x10] sm:$0xf]
    %v55 = vld [vmem:[%s1 + $0x14] sm:$0xf]
    %v56 = vld [vmem:[%s1 + $0x18] sm:$0xf]
    %v57 = vld [vmem:[%s1 + $0x1c] sm:$0xf]
    %v58 = vld [vmem:[%s1 + $0x20] sm:$0xf]
    %v59 = vld [vmem:[%s1 + $0x24] sm:$0xf]
    %v60 = vld [vmem:[%s1 + $0x28] sm:$0xf]
    %v61 = vld [vmem:[%s1 + $0x2c] sm:$0xf]
    %v62 = vld [vmem:[%s1 + $0x30] sm:$0xf]
    %v63 = vld [vmem:[%s1 + $0x34] sm:$0xf]
    %v64 = vld [vmem:[%s1 + $0x38] sm:$0xf]
    %v65 = vld [vmem:[%s1 + $0x3c] sm:$0xf]
    %v66 = vld [vmem:[%s1 + $0x40] sm:$0xf]
    %v67 = vld [vmem:[%s1 + $0x44] sm:$0xf]
    %v68 = vld [vmem:[%s1 + $0x48] sm:$0xf]
    %v69 = vld [vmem:[%s1 + $0x4c] sm:$0xf]
    %v70 = vld [vmem:[%s1 + $0x50] sm:$0xf]
    %v71 = vld [vmem:[%s1 + $0x54] sm:$0xf]
    %v72 = vld [vmem:[%s1 + $0x58] sm:$0xf]
    %v73 = vld [vmem:[%s1 + $0x5c] sm:$0xf]
    %v74 = vld [vmem:[%s1 + $0x60] sm:$0xf]
    %v75 = vld [vmem:[%s1 + $0x64] sm:$0xf]
    %v76 = vld [vmem:[%s1 + $0x68] sm:$0xf]
    %v77 = vld [vmem:[%s1 + $0x6c] sm:$0xf]
    %v78 = vld [vmem:[%s1 + $0x70] sm:$0xf]
    %v79 = vld [vmem:[%s1 + $0x74] sm:$0xf]
    %v80 = vld [vmem:[%s1 + $0x78] sm:$0xf]
    %v81 = vld [vmem:[%s1 + $0x7c] sm:$0xf]
    %v82 = vld [vmem:[%s1 + $0x80] sm:$0xf]
    %v83 = vld [vmem:[%s1 + $0x84] sm:$0xf]
    %v84 = vld [vmem:[%s1 + $0x88] sm:$0xf]
    %v85 = vld [vmem:[%s1 + $0x8c] sm:$0xf]
    %v86 = vld [vmem:[%s1 + $0x90] sm:$0xf]
    %v87 = vld [vmem:[%s1 + $0x94] sm:$0xf]
    %v88 = vld [vmem:[%s1 + $0x98] sm:$0xf]
    %v89 = vld [vmem:[%s1 + $0x9c] sm:$0xf]
    %v90 = vld [vmem:[%s1 + $0xa0] sm:$0xf]
    %v91 = vld [vmem:[%s1 + $0xa4] sm:$0xf]
    %v92 = vld [vmem:[%s1 + $0xa8] sm:$0xf]
    %v93 = vld [vmem:[%s1 + $0xac] sm:$0xf]
    %v94 = vld [vmem:[%s1 + $0xb0] sm:$0xf]
    %v95 = vld [vmem:[%s1 + $0xb4] sm:$0xf]
    %v96 = vld [vmem:[%s1 + $0xb8] sm:$0xf]
    %v97 = vld [vmem:[%s1 + $0xbc] sm:$0xf]
    %v98 = vld [vmem:[%s1 + $0xc0] sm:$0xf]
    %v99 = vld [vmem:[%s1 + $0xc4] sm:$0xf]
    %v100 = vld [vmem:[%s1 + $0xc8] sm:$0xf]
    %v101 = vld [vmem:[%s1 + $0xcc] sm:$0xf]
    %v102 = vld [vmem:[%s1 + $0xd0] sm:$0xf]
    %v103 = vld [vmem:[%s1 + $0xd4] sm:$0xf]
    %v104 = vld [vmem:[%s1 + $0xd8] sm:$0xf]
    %v105 = vld [vmem:[%s1 + $0xdc] sm:$0xf]
    %v106 = vld [vmem:[%s1 + $0xe0] sm:$0xf]
    %v107 = vld [vmem:[%s1 + $0xe4] sm:$0xf]
    %v108 = vld [vmem:[%s1 + $0xe8] sm:$0xf]
    %v109 = vld [vmem:[%s1 + $0xec] sm:$0xf]
    %v110 = vld [vmem:[%s1 + $0xf0] sm:$0xf]
    %v111 = vld [vmem:[%s1 + $0xf4] sm:$0xf]
    %v112 = vld [vmem:[%s1 + $0xf8] sm:$0xf]
    %v113 = vld [vmem:[%s1 + $0xfc] sm:$0xf]
    %v114 = vld [vmem:[%s1 + $0x100] sm:$0xf]
    %v115 = vld [vmem:[%s1 + $0x104] sm:$0xf]
    %v116 = vld [vmem:[%s1 + $0x108] sm:$0xf]
    %v117 = vld [vmem:[%s1 + $0x10c] sm:$0xf]
    %v118 = vld [vmem:[%s1 + $0x110] sm:$0xf]
    %v119 = vld [vmem:[%s1 + $0x114] sm:$0xf]
    %v120 = vld [vmem:[%s1 + $0x118] sm:$0xf]
    %v121 = vld [vmem:[%s1 + $0x11c] sm:$0xf]
    %v122 = vld [vmem:[%s1 + $0x120] sm:$0xf]
    %v123 = vld [vmem:[%s1 + $0x124] sm:$0xf]
    %v124 = vld [vmem:[%s1 + $0x128] sm:$0xf]
    %v125 = vld [vmem:[%s1 + $0x12c] sm:$0xf]
    %v126 = vld [vmem:[%s1 + $0x130] sm:$0xf]
    %v127 = vld [vmem:[%s1 + $0x134] sm:$0xf]
    %v128 = vld [vmem:[%s1 + $0x138] sm:$0xf]
    %v129 = vld [vmem:[%s1 + $0x13c] sm:$0xf]
    %v130 = vld [vmem:[%s1 + $0x140] sm:$0xf]
    %v131 = vld [vmem:[%s1 + $0x144] sm:$0xf]
    %v132 = vld [vmem:[%s1 + $0x148] sm:$0xf]
    %v133 = vld [vmem:[%s1 + $0x14c] sm:$0xf]
    %v134 = vld [vmem:[%s1 + $0x150] sm:$0xf]
    %v135 = vld [vmem:[%s1 + $0x154] sm:$0xf]
    %v136 = vld [vmem:[%s1 + $0x158] sm:$0xf]
    %v137 = vld [vmem:[%s1 + $0x15c] sm:$0xf]
    %v138 = vld [vmem:[%s1 + $0x160] sm:$0xf]
    %v139 = vld [vmem:[%s1 + $0x164] sm:$0xf]
    %v140 = vld [vmem:[%s1 + $0x168] sm:$0xf]
    %v141 = vld [vmem:[%s1 + $0x16c] sm:$0xf]
    %v142 = vld [vmem:[%s1 + $0x170] sm:$0xf]
    %v143 = vld [vmem:[%s1 + $0x174] sm:$0xf]
    %v144 = vld [vmem:[%s1 + $0x178] sm:$0xf]
    %v145 = vld [vmem:[%s1 + $0x17c] sm:$0xf]
    %v146 = vld [vmem:[%s1 + $0x180] sm:$0xf]
    %v147 = vld [vmem:[%s1 + $0x184] sm:$0xf]
    %v148 = vld [vmem:[%s2] sm:$0x1]
    %v150 = vlaneseq
    %v151 = vshrl.u32 %v150, 7
    %v152 = vsub.s32 0, %v151
    %v153 = vrot.slane %v148, %v152
    %v159 = vunpack.c.l.b16 %v46
    %v160 = vunpack.c.h.b16 %v46
    %v161 = vunpack.c.l.b16 %v47
    %v162 = vunpack.c.h.b16 %v47
    %v163 = vunpack.c.l.b16 %v48
    %v164 = vunpack.c.h.b16 %v48
    %v165 = vunpack.c.l.b16 %v49
    %v166 = vpack.c.b16 %v159, %v159
    %v167 = vpack.c.b16 %v160, %v160
    %v168 = vpack.c.b16 %v161, %v161
    %v169 = vpack.c.b16 %v162, %v162
    %v170 = vpack.c.b16 %v163, %v163
    %v171 = vpack.c.b16 %v164, %v164
    %v172 = vpack.c.b16 %v165, %v165
    %v277 = vunpack.c.l.b16 %v50
    %v278 = vunpack.c.l.b16 %v51
    %v279 = vunpack.c.l.b16 %v52
    %v280 = vunpack.c.l.b16 %v53
    %v281 = vunpack.c.l.b16 %v54
    %v282 = vunpack.c.l.b16 %v55
    %v283 = vunpack.c.l.b16 %v56
    %v284 = vunpack.c.l.b16 %v57
    %v285 = vunpack.c.l.b16 %v58
    %v286 = vunpack.c.l.b16 %v59
    %v287 = vunpack.c.l.b16 %v60
    %v288 = vunpack.c.l.b16 %v61
    %v289 = vunpack.c.l.b16 %v62
    %v290 = vunpack.c.l.b16 %v63
    %v291 = vunpack.c.l.b16 %v64
    %v292 = vunpack.c.l.b16 %v65
    %v293 = vunpack.c.l.b16 %v66
    %v294 = vunpack.c.l.b16 %v67
    %v295 = vunpack.c.l.b16 %v68
    %v296 = vunpack.c.l.b16 %v69
    %v297 = vunpack.c.l.b16 %v70
    %v298 = vunpack.c.l.b16 %v71
    %v299 = vunpack.c.l.b16 %v72
    %v300 = vunpack.c.l.b16 %v73
    %v301 = vunpack.c.l.b16 %v74
    %v302 = vunpack.c.l.b16 %v75
    %v303 = vunpack.c.l.b16 %v76
    %v304 = vunpack.c.l.b16 %v77
    %v305 = vunpack.c.l.b16 %v78
    %v306 = vunpack.c.l.b16 %v79
    %v307 = vunpack.c.l.b16 %v80
    %v308 = vunpack.c.l.b16 %v81
    %v309 = vunpack.c.l.b16 %v82
    %v310 = vunpack.c.l.b16 %v83
    %v311 = vunpack.c.l.b16 %v84
    %v312 = vunpack.c.l.b16 %v85
    %v313 = vunpack.c.l.b16 %v86
    %v314 = vunpack.c.l.b16 %v87
    %v315 = vunpack.c.l.b16 %v88
    %v316 = vunpack.c.l.b16 %v89
    %v317 = vunpack.c.l.b16 %v90
    %v318 = vunpack.c.l.b16 %v91
    %v319 = vunpack.c.l.b16 %v92
    %v320 = vunpack.c.l.b16 %v93
    %v321 = vunpack.c.l.b16 %v94
    %v322 = vunpack.c.l.b16 %v95
    %v323 = vunpack.c.l.b16 %v96
    %v324 = vunpack.c.l.b16 %v97
    %v325 = vunpack.c.l.b16 %v98
    %v326 = vunpack.c.l.b16 %v99
    %v327 = vunpack.c.l.b16 %v100
    %v328 = vunpack.c.l.b16 %v101
    %v329 = vunpack.c.l.b16 %v102
    %v330 = vunpack.c.l.b16 %v103
    %v331 = vunpack.c.l.b16 %v104
    %v332 = vunpack.c.l.b16 %v105
    %v333 = vunpack.c.l.b16 %v106
    %v334 = vunpack.c.l.b16 %v107
    %v335 = vunpack.c.l.b16 %v108
    %v336 = vunpack.c.l.b16 %v109
    %v337 = vunpack.c.l.b16 %v110
    %v338 = vunpack.c.l.b16 %v111
    %v339 = vunpack.c.l.b16 %v112
    %v340 = vunpack.c.l.b16 %v113
    %v341 = vunpack.c.l.b16 %v114
    %v342 = vunpack.c.l.b16 %v115
    %v343 = vunpack.c.l.b16 %v116
    %v344 = vunpack.c.l.b16 %v117
    %v345 = vunpack.c.l.b16 %v118
    %v346 = vunpack.c.l.b16 %v119
    %v347 = vunpack.c.l.b16 %v120
    %v348 = vunpack.c.l.b16 %v121
    %v349 = vunpack.c.l.b16 %v122
    %v350 = vunpack.c.l.b16 %v123
    %v351 = vunpack.c.l.b16 %v124
    %v352 = vunpack.c.l.b16 %v125
    %v353 = vunpack.c.l.b16 %v126
    %v354 = vunpack.c.l.b16 %v127
    %v355 = vunpack.c.l.b16 %v128
    %v356 = vunpack.c.l.b16 %v129
    %v357 = vunpack.c.l.b16 %v130
    %v358 = vunpack.c.l.b16 %v131
    %v359 = vunpack.c.l.b16 %v132
    %v360 = vunpack.c.l.b16 %v133
    %v361 = vunpack.c.l.b16 %v134
    %v362 = vunpack.c.l.b16 %v135
    %v363 = vunpack.c.l.b16 %v136
    %v364 = vunpack.c.l.b16 %v137
    %v365 = vunpack.c.l.b16 %v138
    %v366 = vunpack.c.l.b16 %v139
    %v367 = vunpack.c.l.b16 %v140
    %v368 = vunpack.c.l.b16 %v141
    %v369 = vunpack.c.l.b16 %v142
    %v370 = vunpack.c.l.b16 %v143
    %v371 = vunpack.c.l.b16 %v144
    %v372 = vunpack.c.l.b16 %v145
    %v373 = vunpack.c.l.b16 %v146
    %v374 = vunpack.c.l.b16 %v147
    %v375 = vpack.c.b16 %v278, %v277
    %v376 = vpack.c.b16 %v280, %v279
    %v377 = vpack.c.b16 %v282, %v281
    %v378 = vpack.c.b16 %v284, %v283
    %v379 = vpack.c.b16 %v286, %v285
    %v380 = vpack.c.b16 %v288, %v287
    %v381 = vpack.c.b16 %v290, %v289
    %v382 = vpack.c.b16 %v292, %v291
    %v383 = vpack.c.b16 %v294, %v293
    %v384 = vpack.c.b16 %v296, %v295
    %v385 = vpack.c.b16 %v298, %v297
    %v386 = vpack.c.b16 %v300, %v299
    %v387 = vpack.c.b16 %v302, %v301
    %v388 = vpack.c.b16 %v304, %v303
    %v389 = vpack.c.b16 %v306, %v305
    %v390 = vpack.c.b16 %v308, %v307
    %v391 = vpack.c.b16 %v310, %v309
    %v392 = vpack.c.b16 %v312, %v311
    %v393 = vpack.c.b16 %v314, %v313
    %v394 = vpack.c.b16 %v316, %v315
    %v395 = vpack.c.b16 %v318, %v317
    %v396 = vpack.c.b16 %v320, %v319
    %v397 = vpack.c.b16 %v322, %v321
    %v398 = vpack.c.b16 %v324, %v323
    %v399 = vpack.c.b16 %v326, %v325
    %v400 = vpack.c.b16 %v328, %v327
    %v401 = vpack.c.b16 %v330, %v329
    %v402 = vpack.c.b16 %v332, %v331
    %v403 = vpack.c.b16 %v334, %v333
    %v404 = vpack.c.b16 %v336, %v335
    %v405 = vpack.c.b16 %v338, %v337
    %v406 = vpack.c.b16 %v340, %v339
    %v407 = vpack.c.b16 %v342, %v341
    %v408 = vpack.c.b16 %v344, %v343
    %v409 = vpack.c.b16 %v346, %v345
    %v410 = vpack.c.b16 %v348, %v347
    %v411 = vpack.c.b16 %v350, %v349
    %v412 = vpack.c.b16 %v352, %v351
    %v413 = vpack.c.b16 %v354, %v353
    %v414 = vpack.c.b16 %v356, %v355
    %v415 = vpack.c.b16 %v358, %v357
    %v416 = vpack.c.b16 %v360, %v359
    %v417 = vpack.c.b16 %v362, %v361
    %v418 = vpack.c.b16 %v364, %v363
    %v419 = vpack.c.b16 %v366, %v365
    %v420 = vpack.c.b16 %v368, %v367
    %v421 = vpack.c.b16 %v370, %v369
    %v422 = vpack.c.b16 %v372, %v371
    %v423 = vpack.c.b16 %v374, %v373
    %vm473 = vcmask 130048
    %v475 = vsel %vm473, %v172, 0
    %477 = vmatprep.subr.bf16.mxu0 0
    %478 = vmatpush1.bf16.msra.mxu0 %v375
    %479 = vmatprep.subr.bf16.mxu0 0
    %480 = vmatpush1.bf16.msra.mxu0 %v376
    %481 = vmatprep.subr.bf16.mxu0 0
    %482 = vmatpush1.bf16.msra.mxu0 %v377
    %483 = vmatprep.subr.bf16.mxu0 0
    %484 = vmatpush1.bf16.msra.mxu0 %v378
    %485 = vmatprep.subr.bf16.mxu0 0
    %486 = vmatpush1.bf16.msra.mxu0 %v379
    %487 = vmatprep.subr.bf16.mxu0 0
    %488 = vmatpush1.bf16.msra.mxu0 %v380
    %489 = vmatprep.subr.bf16.mxu0 0
    %490 = vmatpush1.bf16.msra.mxu0 %v381
    %491 = vmatprep.subr.bf16.mxu0 0
    %492 = vmatpush1.bf16.msra.mxu0 %v382
    %493 = vmatprep.subr.bf16.mxu0 0
    %494 = vmatpush1.bf16.msra.mxu0 %v383
    %495 = vmatprep.subr.bf16.mxu0 0
    %496 = vmatpush1.bf16.msra.mxu0 %v384
    %497 = vmatprep.subr.bf16.mxu0 0
    %498 = vmatpush1.bf16.msra.mxu0 %v385
    %499 = vmatprep.subr.bf16.mxu0 0
    %500 = vmatpush1.bf16.msra.mxu0 %v386
    %501 = vmatprep.subr.bf16.mxu0 0
    %502 = vmatpush1.bf16.msra.mxu0 %v387
    %503 = vmatprep.subr.bf16.mxu0 0
    %504 = vmatpush1.bf16.msra.mxu0 %v388
    %505 = vmatprep.subr.bf16.mxu0 0
    %506 = vmatpush1.bf16.msra.mxu0 %v389
    %507 = vmatprep.subr.bf16.mxu0 0
    %508 = vmatpush1.bf16.msra.mxu0 %v390
    %509 = vmatprep.mubr.bf16.mxu0 %v167
    %510 = vmatmul.mubr.bf16.gmra.mrb[0].mxu0 %v166
    %v511 = vpop.f32.mrb[0].mxu0
    %v512 = vadd.f32 %v153, %v511
    %v513 = vpop.f32.mrb[0].mxu0
    %v514 = vpop.f32.mrb[0].mxu0
    %v515 = vpop.f32.mrb[0].mxu0
    %516 = vdwg.mxu0
    %517 = vmatprep.subr.bf16.mxu0 0
    %518 = vmatpush1.bf16.msra.mxu0 %v391
    %519 = vmatprep.subr.bf16.mxu0 0
    %520 = vmatpush1.bf16.msra.mxu0 %v392
    %521 = vmatprep.subr.bf16.mxu0 0
    %522 = vmatpush1.bf16.msra.mxu0 %v393
    %523 = vmatprep.subr.bf16.mxu0 0
    %524 = vmatpush1.bf16.msra.mxu0 %v394
    %525 = vmatprep.subr.bf16.mxu0 0
    %526 = vmatpush1.bf16.msra.mxu0 %v395
    %527 = vmatprep.subr.bf16.mxu0 0
    %528 = vmatpush1.bf16.msra.mxu0 %v396
    %529 = vmatprep.subr.bf16.mxu0 0
    %530 = vmatpush1.bf16.msra.mxu0 %v397
    %531 = vmatprep.subr.bf16.mxu0 0
    %532 = vmatpush1.bf16.msra.mxu0 %v398
    %533 = vmatprep.subr.bf16.mxu0 0
    %534 = vmatpush1.bf16.msra.mxu0 %v399
    %535 = vmatprep.subr.bf16.mxu0 0
    %536 = vmatpush1.bf16.msra.mxu0 %v400
    %537 = vmatprep.subr.bf16.mxu0 0
    %538 = vmatpush1.bf16.msra.mxu0 %v401
    %539 = vmatprep.subr.bf16.mxu0 0
    %540 = vmatpush1.bf16.msra.mxu0 %v402
    %541 = vmatprep.subr.bf16.mxu0 0
    %542 = vmatpush1.bf16.msra.mxu0 %v403
    %543 = vmatprep.subr.bf16.mxu0 0
    %544 = vmatpush1.bf16.msra.mxu0 %v404
    %545 = vmatprep.subr.bf16.mxu0 0
    %546 = vmatpush1.bf16.msra.mxu0 %v405
    %547 = vmatprep.subr.bf16.mxu0 0
    %548 = vmatpush1.bf16.msra.mxu0 %v406
    %549 = vmatprep.mubr.bf16.mxu0 %v169
    %550 = vmatmul.mubr.bf16.gmra.mrb[0].mxu0 %v168
    %v551 = vpop.f32.mrb[0].mxu0
    %v552 = vadd.f32 %v512, %v551
    %v553 = vpop.f32.mrb[0].mxu0
    %v554 = vpop.f32.mrb[0].mxu0
    %v555 = vpop.f32.mrb[0].mxu0
    %556 = vdwg.mxu0
    %557 = vmatprep.subr.bf16.mxu0 0
    %558 = vmatpush1.bf16.msra.mxu0 %v407
    %559 = vmatprep.subr.bf16.mxu0 0
    %560 = vmatpush1.bf16.msra.mxu0 %v408
    %561 = vmatprep.subr.bf16.mxu0 0
    %562 = vmatpush1.bf16.msra.mxu0 %v409
    %563 = vmatprep.subr.bf16.mxu0 0
    %564 = vmatpush1.bf16.msra.mxu0 %v410
    %565 = vmatprep.subr.bf16.mxu0 0
    %566 = vmatpush1.bf16.msra.mxu0 %v411
    %567 = vmatprep.subr.bf16.mxu0 0
    %568 = vmatpush1.bf16.msra.mxu0 %v412
    %569 = vmatprep.subr.bf16.mxu0 0
    %570 = vmatpush1.bf16.msra.mxu0 %v413
    %571 = vmatprep.subr.bf16.mxu0 0
    %572 = vmatpush1.bf16.msra.mxu0 %v414
    %573 = vmatprep.subr.bf16.mxu0 0
    %574 = vmatpush1.bf16.msra.mxu0 %v415
    %575 = vmatprep.subr.bf16.mxu0 0
    %576 = vmatpush1.bf16.msra.mxu0 %v416
    %577 = vmatprep.subr.bf16.mxu0 0
    %578 = vmatpush1.bf16.msra.mxu0 %v417
    %579 = vmatprep.subr.bf16.mxu0 0
    %580 = vmatpush1.bf16.msra.mxu0 %v418
    %581 = vmatprep.subr.bf16.mxu0 0
    %582 = vmatpush1.bf16.msra.mxu0 %v419
    %583 = vmatprep.subr.bf16.mxu0 0
    %584 = vmatpush1.bf16.msra.mxu0 %v420
    %585 = vmatprep.subr.bf16.mxu0 0
    %586 = vmatpush1.bf16.msra.mxu0 %v421
    %587 = vmatprep.subr.bf16.mxu0 0
    %588 = vmatpush1.bf16.msra.mxu0 %v422
    %589 = vmatprep.mubr.bf16.mxu0 %v171
    %590 = vmatmul.mubr.bf16.gmra.mrb[0].mxu0 %v170
    %v591 = vpop.f32.mrb[0].mxu0
    %v592 = vadd.f32 %v552, %v591
    %v593 = vpop.f32.mrb[0].mxu0
    %v594 = vpop.f32.mrb[0].mxu0
    %v595 = vpop.f32.mrb[0].mxu0
    %596 = vdwg.mxu0
    %597 = vmatprep.subr.bf16.mxu0 0
    %598 = vmatpush1.bf16.msra.mxu0 %v423
    %599 = vmatprep.subr.bf16.mxu0 0
    %600 = vmatpush1.bf16.msra.mxu0 0
    %601 = vmatprep.subr.bf16.mxu0 0
    %602 = vmatpush1.bf16.msra.mxu0 0
    %603 = vmatprep.subr.bf16.mxu0 0
    %604 = vmatpush1.bf16.msra.mxu0 0
    %605 = vmatprep.subr.bf16.mxu0 0
    %606 = vmatpush1.bf16.msra.mxu0 0
    %607 = vmatprep.subr.bf16.mxu0 0
    %608 = vmatpush1.bf16.msra.mxu0 0
    %609 = vmatprep.subr.bf16.mxu0 0
    %610 = vmatpush1.bf16.msra.mxu0 0
    %611 = vmatprep.subr.bf16.mxu0 0
    %612 = vmatpush1.bf16.msra.mxu0 0
    %613 = vmatprep.subr.bf16.mxu0 0
    %614 = vmatpush1.bf16.msra.mxu0 0
    %615 = vmatprep.subr.bf16.mxu0 0
    %616 = vmatpush1.bf16.msra.mxu0 0
    %617 = vmatprep.subr.bf16.mxu0 0
    %618 = vmatpush1.bf16.msra.mxu0 0
    %619 = vmatprep.subr.bf16.mxu0 0
    %620 = vmatpush1.bf16.msra.mxu0 0
    %621 = vmatprep.subr.bf16.mxu0 0
    %622 = vmatpush1.bf16.msra.mxu0 0
    %623 = vmatprep.subr.bf16.mxu0 0
    %624 = vmatpush1.bf16.msra.mxu0 0
    %625 = vmatprep.subr.bf16.mxu0 0
    %626 = vmatpush1.bf16.msra.mxu0 0
    %627 = vmatprep.subr.bf16.mxu0 0
    %628 = vmatpush1.bf16.msra.mxu0 0
    %629 = vmatprep.mubr.bf16.mxu0 0
    %630 = vmatmul.mubr.bf16.gmra.mrb[0].mxu0 %v475
    %v631 = vpop.f32.mrb[0].mxu0
    %v632 = vadd.f32 %v592, %v631
    %v633 = vpop.f32.mrb[0].mxu0
    %v634 = vpop.f32.mrb[0].mxu0
    %v635 = vpop.f32.mrb[0].mxu0
    %636 = vdwg.mxu0
    %v637 = vmax.f32 %v632, 0.0
    %v638 = vpack.c.bf16 %v637, %v637
    %v639 = vld [vmem:[%s3] sm:$0xf]
    %v640 = vld [vmem:[%s3 + $0x4] sm:$0xf]
    %v641 = vld [vmem:[%s3 + $0x8] sm:$0xf]
    %v642 = vld [vmem:[%s3 + $0xc] sm:$0xf]
    %v643 = vld [vmem:[%s3 + $0x10] sm:$0xf]
    %v644 = vld [vmem:[%s3 + $0x14] sm:$0xf]
    %v645 = vld [vmem:[%s3 + $0x18] sm:$0xf]
    %v646 = vld [vmem:[%s3 + $0x1c] sm:$0xf]
    %v647 = vld [vmem:[%s3 + $0x20] sm:$0xf]
    %v648 = vld [vmem:[%s3 + $0x24] sm:$0xf]
    %v649 = vld [vmem:[%s3 + $0x28] sm:$0xf]
    %v650 = vld [vmem:[%s3 + $0x2c] sm:$0xf]
    %v651 = vld [vmem:[%s3 + $0x30] sm:$0xf]
    %v652 = vld [vmem:[%s3 + $0x34] sm:$0xf]
    %v653 = vld [vmem:[%s3 + $0x38] sm:$0xf]
    %v654 = vld [vmem:[%s3 + $0x3c] sm:$0xf]
    %v655 = vld [vmem:[%s4] sm:$0x1]
    %v657 = vlaneseq
    %v658 = vshrl.u32 %v657, 7
    %v659 = vsub.s32 0, %v658
    %v660 = vrot.slane %v655, %v659
    %v678 = vunpack.c.l.b16 %v639
    %v679 = vunpack.c.l.b16 %v640
    %v680 = vunpack.c.l.b16 %v641
    %v681 = vunpack.c.l.b16 %v642
    %v682 = vunpack.c.l.b16 %v643
    %v683 = vunpack.c.l.b16 %v644
    %v684 = vunpack.c.l.b16 %v645
    %v685 = vunpack.c.l.b16 %v646
    %v686 = vunpack.c.l.b16 %v647
    %v687 = vunpack.c.l.b16 %v648
    %v688 = vunpack.c.l.b16 %v649
    %v689 = vunpack.c.l.b16 %v650
    %v690 = vunpack.c.l.b16 %v651
    %v691 = vunpack.c.l.b16 %v652
    %v692 = vunpack.c.l.b16 %v653
    %v693 = vunpack.c.l.b16 %v654
    %v694 = vpack.c.b16 %v679, %v678
    %v695 = vpack.c.b16 %v681, %v680
    %v696 = vpack.c.b16 %v683, %v682
    %v697 = vpack.c.b16 %v685, %v684
    %v698 = vpack.c.b16 %v687, %v686
    %v699 = vpack.c.b16 %v689, %v688
    %v700 = vpack.c.b16 %v691, %v690
    %v701 = vpack.c.b16 %v693, %v692
    %710 = vmatprep.subr.bf16.mxu0 0
    %711 = vmatpush1.bf16.msra.mxu0 %v694
    %712 = vmatprep.subr.bf16.mxu0 0
    %713 = vmatpush1.bf16.msra.mxu0 %v695
    %714 = vmatprep.subr.bf16.mxu0 0
    %715 = vmatpush1.bf16.msra.mxu0 %v696
    %716 = vmatprep.subr.bf16.mxu0 0
    %717 = vmatpush1.bf16.msra.mxu0 %v697
    %718 = vmatprep.subr.bf16.mxu0 0
    %719 = vmatpush1.bf16.msra.mxu0 %v698
    %720 = vmatprep.subr.bf16.mxu0 0
    %721 = vmatpush1.bf16.msra.mxu0 %v699
    %722 = vmatprep.subr.bf16.mxu0 0
    %723 = vmatpush1.bf16.msra.mxu0 %v700
    %724 = vmatprep.subr.bf16.mxu0 0
    %725 = vmatpush1.bf16.msra.mxu0 %v701
    %726 = vmatprep.subr.bf16.mxu0 0
    %727 = vmatpush1.bf16.msra.mxu0 0
    %728 = vmatprep.subr.bf16.mxu0 0
    %729 = vmatpush1.bf16.msra.mxu0 0
    %730 = vmatprep.subr.bf16.mxu0 0
    %731 = vmatpush1.bf16.msra.mxu0 0
    %732 = vmatprep.subr.bf16.mxu0 0
    %733 = vmatpush1.bf16.msra.mxu0 0
    %734 = vmatprep.subr.bf16.mxu0 0
    %735 = vmatpush1.bf16.msra.mxu0 0
    %736 = vmatprep.subr.bf16.mxu0 0
    %737 = vmatpush1.bf16.msra.mxu0 0
    %738 = vmatprep.subr.bf16.mxu0 0
    %739 = vmatpush1.bf16.msra.mxu0 0
    %740 = vmatprep.subr.bf16.mxu0 0
    %741 = vmatpush1.bf16.msra.mxu0 0
    %742 = vmatprep.mubr.bf16.mxu0 0
    %743 = vmatmul.mubr.bf16.gmra.mrb[0].mxu0 %v638
    %v744 = vpop.f32.mrb[0].mxu0
    %v745 = vadd.f32 %v660, %v744
    %v746 = vpop.f32.mrb[0].mxu0
    %v747 = vpop.f32.mrb[0].mxu0
    %v748 = vpop.f32.mrb[0].mxu0
    %749 = vdwg.mxu0
    %v750 = vmax.f32 %v745, 0.0
    %v751 = vpack.c.bf16 %v750, %v750
    %v752 = vld [vmem:[%s5] sm:$0xf]
    %v753 = vld [vmem:[%s5 + $0x4] sm:$0xf]
    %v754 = vld [vmem:[%s5 + $0x8] sm:$0xf]
    %v755 = vld [vmem:[%s5 + $0xc] sm:$0xf]
    %v756 = vld [vmem:[%s5 + $0x10] sm:$0xf]
    %v757 = vld [vmem:[%s5 + $0x14] sm:$0xf]
    %v758 = vld [vmem:[%s5 + $0x18] sm:$0xf]
    %v759 = vld [vmem:[%s5 + $0x1c] sm:$0xf]
    %v760 = vld [vmem:[%s6] sm:$0x1]
    %v762 = vlaneseq
    %v763 = vshrl.u32 %v762, 7
    %v764 = vsub.s32 0, %v763
    %v765 = vrot.slane %v760, %v764
    %v775 = vunpack.c.l.b16 %v752
    %v776 = vunpack.c.l.b16 %v753
    %v777 = vunpack.c.l.b16 %v754
    %v778 = vunpack.c.l.b16 %v755
    %v779 = vunpack.c.l.b16 %v756
    %v780 = vunpack.c.l.b16 %v757
    %v781 = vunpack.c.l.b16 %v758
    %v782 = vunpack.c.l.b16 %v759
    %v783 = vpack.c.b16 %v776, %v775
    %v784 = vpack.c.b16 %v778, %v777
    %v785 = vpack.c.b16 %v780, %v779
    %v786 = vpack.c.b16 %v782, %v781
    %vm791 = vcmask 523264
    %v793 = vsel %vm791, %v751, 0
    %795 = vmatprep.subr.bf16.mxu0 0
    %796 = vmatpush1.bf16.msra.mxu0 %v783
    %797 = vmatprep.subr.bf16.mxu0 0
    %798 = vmatpush1.bf16.msra.mxu0 %v784
    %799 = vmatprep.subr.bf16.mxu0 0
    %800 = vmatpush1.bf16.msra.mxu0 %v785
    %801 = vmatprep.subr.bf16.mxu0 0
    %802 = vmatpush1.bf16.msra.mxu0 %v786
    %803 = vmatprep.subr.bf16.mxu0 0
    %804 = vmatpush1.bf16.msra.mxu0 0
    %805 = vmatprep.subr.bf16.mxu0 0
    %806 = vmatpush1.bf16.msra.mxu0 0
    %807 = vmatprep.subr.bf16.mxu0 0
    %808 = vmatpush1.bf16.msra.mxu0 0
    %809 = vmatprep.subr.bf16.mxu0 0
    %810 = vmatpush1.bf16.msra.mxu0 0
    %811 = vmatprep.subr.bf16.mxu0 0
    %812 = vmatpush1.bf16.msra.mxu0 0
    %813 = vmatprep.subr.bf16.mxu0 0
    %814 = vmatpush1.bf16.msra.mxu0 0
    %815 = vmatprep.subr.bf16.mxu0 0
    %816 = vmatpush1.bf16.msra.mxu0 0
    %817 = vmatprep.subr.bf16.mxu0 0
    %818 = vmatpush1.bf16.msra.mxu0 0
    %819 = vmatprep.subr.bf16.mxu0 0
    %820 = vmatpush1.bf16.msra.mxu0 0
    %821 = vmatprep.subr.bf16.mxu0 0
    %822 = vmatpush1.bf16.msra.mxu0 0
    %823 = vmatprep.subr.bf16.mxu0 0
    %824 = vmatpush1.bf16.msra.mxu0 0
    %825 = vmatprep.subr.bf16.mxu0 0
    %826 = vmatpush1.bf16.msra.mxu0 0
    %827 = vmatprep.mubr.bf16.mxu0 0
    %828 = vmatmul.mubr.bf16.gmra.mrb[0].mxu0 %v793
    %v829 = vpop.f32.mrb[0].mxu0
    %v830 = vadd.f32 %v765, %v829
    %v831 = vpop.f32.mrb[0].mxu0
    %v832 = vpop.f32.mrb[0].mxu0
    %v833 = vpop.f32.mrb[0].mxu0
    %834 = vdwg.mxu0
    %v835 = vmax.f32 %v830, 0.0
    %v836 = vpack.c.bf16 %v835, %v835
    %v837 = vld [vmem:[%s7] sm:$0xf]
    %v838 = vld [vmem:[%s7 + $0x4] sm:$0x1]
    %v839 = vld [vmem:[%s8] sm:$0x1]
    %v841 = vlaneseq
    %v842 = vshrl.u32 %v841, 7
    %v843 = vsub.s32 0, %v842
    %v844 = vrot.slane %v839, %v843
    %v848 = vunpack.c.l.b16 %v837
    %v849 = vunpack.c.l.b16 %v838
    %v850 = vpack.c.b16 %v849, %v848
    %vm851 = vcmask 80896
    %v853 = vsel %vm851, %v836, 0
    %vm855 = vcmask 1044480
    %v857 = vsel %vm855, %v850, 0
    %859 = vmatprep.subr.bf16.mxu0 0
    %860 = vmatpush1.bf16.msra.mxu0 %v857
    %861 = vmatprep.subr.bf16.mxu0 0
    %862 = vmatpush1.bf16.msra.mxu0 0
    %863 = vmatprep.subr.bf16.mxu0 0
    %864 = vmatpush1.bf16.msra.mxu0 0
    %865 = vmatprep.subr.bf16.mxu0 0
    %866 = vmatpush1.bf16.msra.mxu0 0
    %867 = vmatprep.subr.bf16.mxu0 0
    %868 = vmatpush1.bf16.msra.mxu0 0
    %869 = vmatprep.subr.bf16.mxu0 0
    %870 = vmatpush1.bf16.msra.mxu0 0
    %871 = vmatprep.subr.bf16.mxu0 0
    %872 = vmatpush1.bf16.msra.mxu0 0
    %873 = vmatprep.subr.bf16.mxu0 0
    %874 = vmatpush1.bf16.msra.mxu0 0
    %875 = vmatprep.subr.bf16.mxu0 0
    %876 = vmatpush1.bf16.msra.mxu0 0
    %877 = vmatprep.subr.bf16.mxu0 0
    %878 = vmatpush1.bf16.msra.mxu0 0
    %879 = vmatprep.subr.bf16.mxu0 0
    %880 = vmatpush1.bf16.msra.mxu0 0
    %881 = vmatprep.subr.bf16.mxu0 0
    %882 = vmatpush1.bf16.msra.mxu0 0
    %883 = vmatprep.subr.bf16.mxu0 0
    %884 = vmatpush1.bf16.msra.mxu0 0
    %885 = vmatprep.subr.bf16.mxu0 0
    %886 = vmatpush1.bf16.msra.mxu0 0
    %887 = vmatprep.subr.bf16.mxu0 0
    %888 = vmatpush1.bf16.msra.mxu0 0
    %889 = vmatprep.subr.bf16.mxu0 0
    %890 = vmatpush1.bf16.msra.mxu0 0
    %891 = vmatprep.mubr.bf16.mxu0 0
    %892 = vmatmul.mubr.bf16.gmra.mrb[0].mxu0 %v853
    %v893 = vpop.f32.mrb[0].mxu0
    %v894 = vadd.f32 %v844, %v893
    %v895 = vpop.f32.mrb[0].mxu0
    %v896 = vpop.f32.mrb[0].mxu0
    %v897 = vpop.f32.mrb[0].mxu0
    %898 = vdwg.mxu0
    %v899 = vmax.f32 %v894, 0.0
    %v900 = vpack.c.bf16 %v899, %v899
    %v901 = vld [vmem:[%s9] sm:$0xf]
    %v902 = vld [vmem:[%s9 + $0x4] sm:$0x1]
    %v903 = vld [vmem:[%s10] sm:$0x1]
    %v905 = vlaneseq
    %v906 = vshrl.u32 %v905, 7
    %v907 = vsub.s32 0, %v906
    %v908 = vrot.slane %v903, %v907
    %v912 = vunpack.c.l.b16 %v901
    %v913 = vunpack.c.l.b16 %v902
    %v914 = vpack.c.b16 %v913, %v912
    %v916 = vsel %vm851, %v900, 0
    %v919 = vsel %vm855, %v914, 0
    %921 = vmatprep.subr.bf16.mxu0 0
    %922 = vmatpush1.bf16.msra.mxu0 %v919
    %923 = vmatprep.subr.bf16.mxu0 0
    %924 = vmatpush1.bf16.msra.mxu0 0
    %925 = vmatprep.subr.bf16.mxu0 0
    %926 = vmatpush1.bf16.msra.mxu0 0
    %927 = vmatprep.subr.bf16.mxu0 0
    %928 = vmatpush1.bf16.msra.mxu0 0
    %929 = vmatprep.subr.bf16.mxu0 0
    %930 = vmatpush1.bf16.msra.mxu0 0
    %931 = vmatprep.subr.bf16.mxu0 0
    %932 = vmatpush1.bf16.msra.mxu0 0
    %933 = vmatprep.subr.bf16.mxu0 0
    %934 = vmatpush1.bf16.msra.mxu0 0
    %935 = vmatprep.subr.bf16.mxu0 0
    %936 = vmatpush1.bf16.msra.mxu0 0
    %937 = vmatprep.subr.bf16.mxu0 0
    %938 = vmatpush1.bf16.msra.mxu0 0
    %939 = vmatprep.subr.bf16.mxu0 0
    %940 = vmatpush1.bf16.msra.mxu0 0
    %941 = vmatprep.subr.bf16.mxu0 0
    %942 = vmatpush1.bf16.msra.mxu0 0
    %943 = vmatprep.subr.bf16.mxu0 0
    %944 = vmatpush1.bf16.msra.mxu0 0
    %945 = vmatprep.subr.bf16.mxu0 0
    %946 = vmatpush1.bf16.msra.mxu0 0
    %947 = vmatprep.subr.bf16.mxu0 0
    %948 = vmatpush1.bf16.msra.mxu0 0
    %949 = vmatprep.subr.bf16.mxu0 0
    %950 = vmatpush1.bf16.msra.mxu0 0
    %951 = vmatprep.subr.bf16.mxu0 0
    %952 = vmatpush1.bf16.msra.mxu0 0
    %953 = vmatprep.mubr.bf16.mxu0 0
    %954 = vmatmul.mubr.bf16.gmra.mrb[0].mxu0 %v916
    %v955 = vpop.f32.mrb[0].mxu0
    %v956 = vadd.f32 %v908, %v955
    %v957 = vpop.f32.mrb[0].mxu0
    %v958 = vpop.f32.mrb[0].mxu0
    %v959 = vpop.f32.mrb[0].mxu0
    %960 = vdwg.mxu0
    %v961 = vmax.f32 %v956, 0.0
    %v962 = vpack.c.bf16 %v961, %v961
    %v963 = vld [vmem:[%s11] sm:$0xf]
    %v964 = vld [vmem:[%s11 + $0x4] sm:$0x1]
    %v965 = vld [vmem:[%s12] sm:$0x1]
    %v967 = vlaneseq
    %v968 = vshrl.u32 %v967, 7
    %v969 = vsub.s32 0, %v968
    %v970 = vrot.slane %v965, %v969
    %v974 = vunpack.c.l.b16 %v963
    %v975 = vunpack.c.l.b16 %v964
    %v976 = vpack.c.b16 %v975, %v974
    %v978 = vsel %vm851, %v962, 0
    %v981 = vsel %vm855, %v976, 0
    %983 = vmatprep.subr.bf16.mxu0 0
    %984 = vmatpush1.bf16.msra.mxu0 %v981
    %985 = vmatprep.subr.bf16.mxu0 0
    %986 = vmatpush1.bf16.msra.mxu0 0
    %987 = vmatprep.subr.bf16.mxu0 0
    %988 = vmatpush1.bf16.msra.mxu0 0
    %989 = vmatprep.subr.bf16.mxu0 0
    %990 = vmatpush1.bf16.msra.mxu0 0
    %991 = vmatprep.subr.bf16.mxu0 0
    %992 = vmatpush1.bf16.msra.mxu0 0
    %993 = vmatprep.subr.bf16.mxu0 0
    %994 = vmatpush1.bf16.msra.mxu0 0
    %995 = vmatprep.subr.bf16.mxu0 0
    %996 = vmatpush1.bf16.msra.mxu0 0
    %997 = vmatprep.subr.bf16.mxu0 0
    %998 = vmatpush1.bf16.msra.mxu0 0
    %999 = vmatprep.subr.bf16.mxu0 0
    %1000 = vmatpush1.bf16.msra.mxu0 0
    %1001 = vmatprep.subr.bf16.mxu0 0
    %1002 = vmatpush1.bf16.msra.mxu0 0
    %1003 = vmatprep.subr.bf16.mxu0 0
    %1004 = vmatpush1.bf16.msra.mxu0 0
    %1005 = vmatprep.subr.bf16.mxu0 0
    %1006 = vmatpush1.bf16.msra.mxu0 0
    %1007 = vmatprep.subr.bf16.mxu0 0
    %1008 = vmatpush1.bf16.msra.mxu0 0
    %1009 = vmatprep.subr.bf16.mxu0 0
    %1010 = vmatpush1.bf16.msra.mxu0 0
    %1011 = vmatprep.subr.bf16.mxu0 0
    %1012 = vmatpush1.bf16.msra.mxu0 0
    %1013 = vmatprep.subr.bf16.mxu0 0
    %1014 = vmatpush1.bf16.msra.mxu0 0
    %1015 = vmatprep.mubr.bf16.mxu0 0
    %1016 = vmatmul.mubr.bf16.gmra.mrb[0].mxu0 %v978
    %v1017 = vpop.f32.mrb[0].mxu0
    %v1018 = vadd.f32 %v970, %v1017
    %v1019 = vpop.f32.mrb[0].mxu0
    %v1020 = vpop.f32.mrb[0].mxu0
    %v1021 = vpop.f32.mrb[0].mxu0
    %1022 = vdwg.mxu0
    %v1023 = vmax.f32 %v1018, 0.0
    %v1024 = vlaneseq
    %v1025 = vand.u32 %v1024, 127
    %vm1026 = vcmp.lt.s32.totalorder %v1025, 10
    %v1027 = vsel %vm1026, %v1023, -1e+30
    %1028 = vmax.xlane.f32.xlu0 %v1027
    %v1029 = vpop.xlane.xlu0 %1028
    %v1030 = vsub.f32 %v1027, %v1029
    %v1031 = vmul.f32 %v1030, 1.442695
    %v1032 = vpow.pop %v1031
    %v1033 = vsel %vm1026, %v1032, 0.0
    %1034 = vadd.xlane.f32.xlu0 %v1033
    %v1035 = vpop.xlane.xlu0 %1034
    %v1036 = vlog2.pop %v1035
    %v1037 = vmul.f32 %v1036, 0.6931472
    %v1038 = vsub.f32 %v1030, %v1037
    %v1039 = vsel %vm1026, %v1038, 0.0
    %1040 = vst [vmem:[#allocation2] sm:$0xff] %v1039
    // Predicated region
    $region54: #{neural_net_e_forward.1} parent=1 // pred_check
      _
    $region55: #{neural_net_e_forward.1} parent=1 // pred_check_branch
      %1042 = sbr.rel (0) target = $region57
    $region56: #{neural_net_e_forward.1} parent=1 // pred_region
      %s1044 = ssub.s32 128, 128
      %1045 = vsyncadd [#allocation3], %s1044
      %s1047 = sshll.u32 [#allocation2], 4
      %s1048 = int_to_ptr.vmem [resolvable:$true] %s1047
      %1050 = dma.vmem_to_hbm [thread:$0]  %s1048, 128, %s13, [#allocation3]
    $region57: #{neural_net_e_forward.1} parent=1 // pred_fallthru
      _
    // Predicated region
    $region58: #{neural_net_e_forward.1} parent=1 // pred_check
      _
    $region59: #{neural_net_e_forward.1} parent=1 // pred_check_branch
      %1052 = sbr.rel (0) target = $region61
    $region60: #{neural_net_e_forward.1} parent=1 // pred_region
      %1053 = dma.done [#allocation3], 128
    $region61: #{neural_net_e_forward.1} parent=1 // pred_fallthru
      _
    %1054 = vsyncpa [#allocation3], 1

</llo_original>
